<compile_context>
chip_gen: v5e
topology: v5e:2x2
jax: 0.10.0
libtpu: 0.0.40
codegen_flags: <defaults>
</compile_context>

<pallas_src>
import functools
import math

import numpy as np
import jax
import jax.numpy as jnp
import jax.scipy.stats as jsp_stats
from jax.experimental import pallas as pl
from jax.experimental.pallas import tpu as pltpu

_SQRT2 = math.sqrt(2.0)


# ----------------------------------------------------------------------------- #
# In-kernel erf (Abramowitz & Stegun 7.1.26, max abs error ~1.5e-7).
# Runs only on (1, TQ) rows, so use the exact reciprocal (protects log(probs)).
# ----------------------------------------------------------------------------- #
def _erf(x):
    a1, a2, a3, a4, a5 = 0.254829592, -0.284496736, 1.421413741, -1.453152027, 1.061405429
    p = 0.3275911
    sgn = jnp.where(x >= 0.0, 1.0, -1.0)
    ax = jnp.abs(x)
    t = 1.0 / (1.0 + p * ax)
    poly = ((((a5 * t + a4) * t + a3) * t + a2) * t + a1) * t
    return sgn * (1.0 - poly * jnp.exp(-ax * ax))


# ----------------------------------------------------------------------------- #
# Pallas kernel.
# Grid: (num_q_tiles, S-2); s is the innermost axis so the A/P blocks and the
# per-q-tile cache are reused for every negative slot.  Inputs are fused
# (rows, TQ) blocks with layout [var_row; mu rows (dm); zero rows].
# ----------------------------------------------------------------------------- #
def _btl_kernel(a_ref, p_ref, n_ref, out_ref, qcache_ref,
                *, margin, var_prior, dm_real, m_real):
    s = pl.program_id(1)

    dm_f = float(dm_real)
    m_f = float(m_real)
    inv_vp = 1.0 / var_prior

    # ---- per-query (anchor/positive only) terms: once per q-tile -------------
    @pl.when(s == 0)
    def _per_query():
        A = a_ref[...]
        P = p_ref[...]
        varA = a_ref[0:1, :]
        varP = p_ref[0:1, :]
        d = P - A
        # Full-block reductions include the var-row cross terms; subtract them.
        s_pa = jnp.sum(d * d, axis=0, keepdims=True) - (varP - varA) ** 2
        s_a2 = jnp.sum(A * A, axis=0, keepdims=True) - varA * varA
        s_p2 = jnp.sum(P * P, axis=0, keepdims=True) - varP * varP
        qcache_ref[0:1, :] = s_pa + dm_f * varP                                 # mu_q
        qcache_ref[1:2, :] = (2.0 * dm_f * varP * varP
                              + 4.0 * dm_f * varA * varP
                              + 4.0 * varP * s_pa)                              # sig_q
        qcache_ref[2:3, :] = varA
        qcache_ref[3:4, :] = (inv_vp * (varA + varP)
                              + (inv_vp / m_f) * (s_a2 + s_p2)
                              - jnp.log(varA) - jnp.log(varP))                  # kl_q
        qcache_ref[4:5, :] = s_a2
        qcache_ref[5:6, :] = s_p2
        qcache_ref[6:7, :] = varP
        out_ref[...] = jnp.zeros_like(out_ref)

    A = a_ref[...]
    P = p_ref[...]
    N = n_ref[...]
    varN = n_ref[0:1, :]

    mu_q = qcache_ref[0:1, :]
    sig_q = qcache_ref[1:2, :]
    varA = qcache_ref[2:3, :]
    kl_q = qcache_ref[3:4, :]
    s_a2 = qcache_ref[4:5, :]
    s_p2 = qcache_ref[5:6, :]
    varP = qcache_ref[6:7, :]

    # Negative-dependent streamed work: 3 products + 3 reductions, no (rows,TQ)
    # difference temporaries (algebraic expansion of the squared distances).
    t_nn = jnp.sum(N * N, axis=0, keepdims=True)
    t_an = jnp.sum(A * N, axis=0, keepdims=True)
    t_pn = jnp.sum(P * N, axis=0, keepdims=True)
    s_n2 = t_nn - varN * varN
    c_an = t_an - varA * varN
    c_pn = t_pn - varP * varN
    s_na = s_n2 - 2.0 * c_an + s_a2
    s_pn = s_p2 - 2.0 * c_pn + s_n2

    mu = mu_q - s_na - dm_f * varN
    sigma2 = (sig_q
              + 2.0 * dm_f * varN * varN
              + 4.0 * varN * s_na
              + 4.0 * varA * (dm_f * varN + s_pn))
    sigma = jnp.sqrt(jnp.maximum(sigma2, 0.0))          # clamp: avoid NaN from roundoff

    z = (margin - mu) / ((sigma + 1e-8) * _SQRT2)
    probs = 0.5 * (1.0 + _erf(z))                       # Normal(mu, sigma+1e-8).cdf(margin)
    nll = -jnp.log(probs + 1e-8)

    kl_col = 0.5 * (kl_q + inv_vp * varN + (inv_vp / m_f) * s_n2 - jnp.log(varN))

    out_ref[...] += jnp.concatenate([nll, kl_col], axis=0)


# ----------------------------------------------------------------------------- #
# Host-side glue.
# ----------------------------------------------------------------------------- #
def _round_up(v, m):
    return ((v + m - 1) // m) * m


def _pick_tile(rows, nq):
    """Generation-aware lane-dense query tile + VMEM limit."""
    try:
        cap = int(pltpu.get_tpu_info().vmem_capacity_bytes)
    except Exception:
        cap = 64 * 1024 * 1024                 # conservative (v7x per-TC)
    budget = int(cap * 0.7)
    tq_max = _round_up(max(nq, 1), 128)
    tq = 128
    # need ~ 3 inputs x 2 buffers x rows + elementwise temps (~2*rows) + misc
    for cand in (2048, 1024, 512, 256, 128):
        if cand > tq_max:
            continue
        if (8 * rows + 64) * cand * 4 <= budget:
            tq = cand
            break
    need = (8 * rows + 64) * tq * 4
    vmem_limit = max(32 * 1024 * 1024, min(need + 16 * 1024 * 1024, cap - 4 * 1024 * 1024))
    # TODO(synk): if `need` still exceeds the budget at tq=128 (very large D),
    # tile the embedding dim as an extra innermost 'arbitrary' grid axis instead
    # of raising vmem_limit further.
    return tq, int(vmem_limit)


def _prepare_inputs(x, label):
    # TODO(synk): label-dependent grouping uses concrete (host) label values,
    # exactly like the torch .item()/boolean-mask indexing; labels are static per call.
    label = np.asarray(label)
    D, n_tot = x.shape
    nq = int(np.sum(label == -1))
    S = n_tot // nq
    dm = D - 1
    m_real = (S - 2) * nq
    rows = _round_up(dm + 1, 8)                # fused block height: [var; mu...; zeros]

    tq, vmem_limit = _pick_tile(rows, nq)
    nq_pad = _round_up(nq, tq)

    idx_a = np.flatnonzero(label == -1)
    idx_p = np.flatnonzero(label == 1)
    idx_n = np.flatnonzero(label == 0)
    idx_n_smaj = idx_n.reshape(nq, S - 2).T    # (S-2, nq): negative #s of query q

    # Single fused re-layout pass: append a zero row (for row padding) and a pad
    # column (var=1, mu=0 for padded query columns), permute rows once, then one
    # column gather per output array.
    x_ext = jnp.concatenate([x, jnp.zeros((1, n_tot), x.dtype)], axis=0)        # (D+1, n_tot)
    row_idx = np.concatenate([[dm], np.arange(dm), np.full(rows - dm - 1, D)]).astype(np.int32)
    x_rows = jnp.take(x_ext, jnp.asarray(row_idx), axis=0)                      # (rows, n_tot)
    pad_col = jnp.zeros((rows, 1), x.dtype).at[0, 0].set(1.0)
    x_cols = jnp.concatenate([x_rows, pad_col], axis=1)                         # (rows, n_tot+1)

    pad_idx = np.full(nq_pad - nq, n_tot, np.int32)
    col_a = np.concatenate([idx_a, pad_idx]).astype(np.int32)
    col_p = np.concatenate([idx_p, pad_idx]).astype(np.int32)
    col_n = np.concatenate(
        [np.concatenate([idx_n_smaj[s], pad_idx]) for s in range(S - 2)]).astype(np.int32)

    A = jnp.take(x_cols, jnp.asarray(col_a), axis=1)        # (rows, nq_pad)       compact
    P = jnp.take(x_cols, jnp.asarray(col_p), axis=1)        # (rows, nq_pad)       compact
    Nn = jnp.take(x_cols, jnp.asarray(col_n), axis=1)       # (rows, (S-2)*nq_pad) s-major

    meta = dict(nq=nq, nq_pad=nq_pad, tq=tq, S=S, dm=dm, m_real=m_real,
                rows=rows, vmem_limit=vmem_limit)
    return A, P, Nn, meta


def bayesian_triplet_loss(x, label, *, margin, var_prior, kl_scale_factor=1e-6):
    x = jnp.asarray(x, jnp.float32)
    A, P, Nn, meta = _prepare_inputs(x, label)
    rows, tq, nq_pad = meta["rows"], meta["tq"], meta["nq_pad"]
    S, m_real, nq, dm = meta["S"], meta["m_real"], meta["nq"], meta["dm"]

    # Same constraint the original torch kl_div_gauss broadcasting imposes.
    assert dm == m_real, "original kl_div_gauss broadcasting requires D-1 == (S-2)*nq"

    n_q_tiles = nq_pad // tq
    n_s = S - 2

    kernel = functools.partial(
        _btl_kernel,
        margin=float(margin),
        var_prior=float(var_prior),
        dm_real=int(dm),
        m_real=int(m_real),
    )

    grid_spec = pltpu.PrefetchScalarGridSpec(
        num_scalar_prefetch=0,
        grid=(n_q_tiles, n_s),            # s innermost -> A/P blocks + qcache reused
        in_specs=[
            pl.BlockSpec((rows, tq), lambda jq, s: (0, jq)),                   # A (compact)
            pl.BlockSpec((rows, tq), lambda jq, s: (0, jq)),                   # P (compact)
            pl.BlockSpec((rows, tq), lambda jq, s: (0, s * n_q_tiles + jq)),   # N (s-major)
        ],
        out_specs=pl.BlockSpec((2, tq), lambda jq, s: (0, jq)),                # per-tile partials
        scratch_shapes=[pltpu.VMEM((8, tq), jnp.float32)],                     # per-q-tile cache
    )

    col_sums = pl.pallas_call(
        kernel,
        out_shape=jax.ShapeDtypeStruct((2, nq_pad), jnp.float32),
        grid_spec=grid_spec,
        compiler_params=pltpu.CompilerParams(
            dimension_semantics=("parallel", "arbitrary"),
            vmem_limit_bytes=meta["vmem_limit"],
        ),
    )(A, P, Nn)

    # Final reduction in plain JAX; padded query columns are simply dropped.
    m_f = float(m_real)
    nll_mean = jnp.sum(col_sums[0, :nq]) / m_f
    kl = jnp.sum(col_sums[1, :nq]) + 1.5 * m_f * (math.log(float(var_prior)) - 1.0)
    return nll_mean + kl_scale_factor * kl


# ----------------------------------------------------------------------------- #
# Pure-JAX reference (mirrors the PyTorch code line-for-line) for verification.
# ----------------------------------------------------------------------------- #
def _reference_loss(x, label, *, margin, var_prior, kl_scale_factor=1e-6):
    label = np.asarray(label)
    D, n_tot = x.shape
    nq = int(np.sum(label == -1))
    S = n_tot // nq
    idx_a = np.flatnonzero(label == -1)
    idx_p = np.flatnonzero(label == 1)
    idx_n = np.flatnonzero(label == 0)

    A = jnp.repeat(x[:, idx_a], S - 2, axis=1)
    P = jnp.repeat(x[:, idx_p], S - 2, axis=1)
    Nn = x[:, idx_n]
    muA, varA = A[:-1], A[-1:]
    muP, varP = P[:-1], P[-1:]
    muN, varN = Nn[:-1], Nn[-1:]

    muA2, muP2, muN2 = muA ** 2, muP ** 2, muN ** 2
    varP2, varN2 = varP ** 2, varN ** 2
    mu = jnp.sum(muP2 + varP - muN2 - varN - 2 * muA * (muP - muN), axis=0)
    T1 = (varP2 + 2 * muP2 * varP + 2 * (varA + muA2) * (varP + muP2)
          - 2 * muA2 * muP2 - 4 * muA * muP * varP)
    T2 = (varN2 + 2 * muN2 * varN + 2 * (varA + muA2) * (varN + muN2)
          - 2 * muA2 * muN2 - 4 * muA * muN * varN)
    T3 = 4 * muP * muN * varA
    sigma2 = jnp.sum(2 * T1 + 2 * T2 - 2 * T3, axis=0)
    sigma = sigma2 ** 0.5
    probs = jsp_stats.norm.cdf(jnp.float32(margin), loc=mu, scale=sigma + 1e-8)
    nll = jnp.mean(-jnp.log(probs + 1e-8))

    def kl_div_gauss(mu_q, var_q, mu_p, var_p):
        _, D_ = mu_q.shape
        kl = 0.5 * (var_q / var_p * D_
                    + 1.0 / var_p * jnp.sum(mu_p ** 2 + mu_q ** 2 - 2 * mu_p * mu_q, axis=1)
                    - D_ + D_ * (jnp.log(var_p) - jnp.log(var_q)))
        return kl.mean()

    mu_prior = jnp.zeros_like(muA)
    var_prior_row = jnp.ones_like(varA) * var_prior
    kl = (kl_div_gauss(muA, varA, mu_prior, var_prior_row)
          + kl_div_gauss(muP, varP, mu_prior, var_prior_row)
          + kl_div_gauss(muN, varN, mu_prior, var_prior_row))
    return nll + kl_scale_factor * kl


if __name__ == "__main__":
    # Small deterministic example: nq=4 queries, S=4 samples per query
    # (1 anchor, 1 positive, 2 negatives), embedding dim Dm=8, so D=9, Ntot=16.
    nq, S = 4, 4
    Dm = (S - 2) * nq            # 8  (must equal D-1: torch broadcasting constraint)
    D = Dm + 1                   # 9
    n_tot = nq * S               # 16

    key = jax.random.PRNGKey(0)
    k1, k2 = jax.random.split(key)
    mu_rows = jax.random.normal(k1, (Dm, n_tot), dtype=jnp.float32)
    var_row = jnp.abs(jax.random.normal(k2, (1, n_tot), dtype=jnp.float32)) * 0.2 + 0.1
    x = jnp.concatenate([mu_rows, var_row], axis=0)          # (D, Ntot), f32

    # per-query tuple layout: [anchor, positive, negative, negative]
    label = np.array([-1, 1, 0, 0] * nq, dtype=np.int32)

    margin = 0.0
    var_prior = 1.0 / Dm
    kl_scale = 1e-6

    loss = bayesian_triplet_loss(x, label, margin=margin, var_prior=var_prior,
                                 kl_scale_factor=kl_scale)
    loss = jax.block_until_ready(loss)

    ref = jax.block_until_ready(
        _reference_loss(x, label, margin=margin, var_prior=var_prior,
                        kl_scale_factor=kl_scale))

    assert np.allclose(np.asarray(loss), np.asarray(ref), rtol=2e-3, atol=2e-3), (loss, ref)
    print("KERNEL_OK")
</pallas_src>

<mosaic_0001>
module attributes {stable_mosaic.version = 11 : i64} {
  func.func @_btl_kernel(%arg0: i32, %arg1: i32, %arg2: memref<16x128xf32, #tpu.memory_space<vmem>>, %arg3: memref<16x128xf32, #tpu.memory_space<vmem>>, %arg4: memref<16x128xf32, #tpu.memory_space<vmem>>, %arg5: memref<2x128xf32, #tpu.memory_space<vmem>>, %arg6: memref<8x128xf32, #tpu.memory_space<vmem>>) attributes {dimension_semantics = [#tpu.dimension_semantics<parallel>, #tpu.dimension_semantics<arbitrary>], iteration_bounds = array<i64: 1, 2>, scalar_prefetch = 0 : i64, scratch_operands = 1 : i64, tpu.core_type = #tpu.core_type<tc>, window_params = [{transform_indices = @transform_0, window_bounds = array<i64: 16, 128>}, {transform_indices = @transform_1, window_bounds = array<i64: 16, 128>}, {transform_indices = @transform_2, window_bounds = array<i64: 16, 128>}, {transform_indices = @transform_3, window_bounds = array<i64: 2, 128>}]} {
    %c0_i32 = arith.constant 0 : i32
    %0 = arith.cmpi eq, %arg1, %c0_i32 : i32
    %1 = arith.extui %0 : i1 to i32
    %c0_i32_0 = arith.constant 0 : i32
    %2 = arith.cmpi ne, %1, %c0_i32_0 : i32
    scf.if %2 {
      %c0_53 = arith.constant 0 : index
      %c0_54 = arith.constant 0 : index
      %123 = vector.load %arg2[%c0_53, %c0_54] : memref<16x128xf32, #tpu.memory_space<vmem>>, vector<16x128xf32>
      %c0_55 = arith.constant 0 : index
      %c0_56 = arith.constant 0 : index
      %124 = vector.load %arg3[%c0_55, %c0_56] : memref<16x128xf32, #tpu.memory_space<vmem>>, vector<16x128xf32>
      %c0_57 = arith.constant 0 : index
      %c0_58 = arith.constant 0 : index
      %125 = vector.load %arg2[%c0_57, %c0_58] : memref<16x128xf32, #tpu.memory_space<vmem>>, vector<1x128xf32>
      %c0_59 = arith.constant 0 : index
      %c0_60 = arith.constant 0 : index
      %126 = vector.load %arg3[%c0_59, %c0_60] : memref<16x128xf32, #tpu.memory_space<vmem>>, vector<1x128xf32>
      %127 = arith.subf %124, %123 : vector<16x128xf32>
      %128 = arith.mulf %127, %127 : vector<16x128xf32>
      %cst_61 = arith.constant dense<0.000000e+00> : vector<128xf32>
      %129 = vector.multi_reduction <add>, %128, %cst_61 [0] : vector<16x128xf32> to vector<128xf32>
      %130 = vector.shape_cast %129 : vector<128xf32> to vector<1x128xf32>
      %131 = arith.subf %126, %125 : vector<1x128xf32>
      %132 = arith.mulf %131, %131 : vector<1x128xf32>
      %133 = arith.subf %130, %132 : vector<1x128xf32>
      %134 = arith.mulf %123, %123 : vector<16x128xf32>
      %cst_62 = arith.constant dense<0.000000e+00> : vector<128xf32>
      %135 = vector.multi_reduction <add>, %134, %cst_62 [0] : vector<16x128xf32> to vector<128xf32>
      %136 = vector.shape_cast %135 : vector<128xf32> to vector<1x128xf32>
      %137 = arith.mulf %125, %125 : vector<1x128xf32>
      %138 = arith.subf %136, %137 : vector<1x128xf32>
      %139 = arith.mulf %124, %124 : vector<16x128xf32>
      %cst_63 = arith.constant dense<0.000000e+00> : vector<128xf32>
      %140 = vector.multi_reduction <add>, %139, %cst_63 [0] : vector<16x128xf32> to vector<128xf32>
      %141 = vector.shape_cast %140 : vector<128xf32> to vector<1x128xf32>
      %142 = arith.mulf %126, %126 : vector<1x128xf32>
      %143 = arith.subf %141, %142 : vector<1x128xf32>
      %cst_64 = arith.constant 8.000000e+00 : f32
      %144 = vector.broadcast %cst_64 : f32 to vector<1x128xf32>
      %145 = arith.mulf %144, %126 : vector<1x128xf32>
      %146 = arith.addf %133, %145 : vector<1x128xf32>
      %c0_65 = arith.constant 0 : index
      %c0_66 = arith.constant 0 : index
      %147 = vector.load %arg6[%c0_65, %c0_66] : memref<8x128xf32, #tpu.memory_space<vmem>>, vector<1x128xf32>
      tpu.vector_store %arg6[%c0_65, %c0_66], %146 {strides = array<i32>} : memref<8x128xf32, #tpu.memory_space<vmem>>, vector<1x128xf32>,
      %cst_67 = arith.constant 1.600000e+01 : f32
      %148 = vector.broadcast %cst_67 : f32 to vector<1x128xf32>
      %149 = arith.mulf %148, %126 : vector<1x128xf32>
      %150 = arith.mulf %149, %126 : vector<1x128xf32>
      %cst_68 = arith.constant 3.200000e+01 : f32
      %151 = vector.broadcast %cst_68 : f32 to vector<1x128xf32>
      %152 = arith.mulf %151, %125 : vector<1x128xf32>
      %153 = arith.mulf %152, %126 : vector<1x128xf32>
      %154 = arith.addf %150, %153 : vector<1x128xf32>
      %cst_69 = arith.constant 4.000000e+00 : f32
      %155 = vector.broadcast %cst_69 : f32 to vector<1x128xf32>
      %156 = arith.mulf %155, %126 : vector<1x128xf32>
      %157 = arith.mulf %156, %133 : vector<1x128xf32>
      %158 = arith.addf %154, %157 : vector<1x128xf32>
      %c1_70 = arith.constant 1 : index
      %c0_71 = arith.constant 0 : index
      %159 = vector.load %arg6[%c1_70, %c0_71] : memref<8x128xf32, #tpu.memory_space<vmem>>, vector<1x128xf32>
      tpu.vector_store %arg6[%c1_70, %c0_71], %158 {strides = array<i32>} : memref<8x128xf32, #tpu.memory_space<vmem>>, vector<1x128xf32>,
      %c2_72 = arith.constant 2 : index
      %c0_73 = arith.constant 0 : index
      %160 = vector.load %arg6[%c2_72, %c0_73] : memref<8x128xf32, #tpu.memory_space<vmem>>, vector<1x128xf32>
      tpu.vector_store %arg6[%c2_72, %c0_73], %125 {strides = array<i32>} : memref<8x128xf32, #tpu.memory_space<vmem>>, vector<1x128xf32>,
      %161 = arith.addf %125, %126 : vector<1x128xf32>
      %cst_74 = arith.constant 8.000000e+00 : f32
      %162 = vector.broadcast %cst_74 : f32 to vector<1x128xf32>
      %163 = arith.mulf %162, %161 : vector<1x128xf32>
      %164 = arith.addf %138, %143 : vector<1x128xf32>
      %cst_75 = arith.constant 1.000000e+00 : f32
      %165 = vector.broadcast %cst_75 : f32 to vector<1x128xf32>
      %166 = arith.mulf %165, %164 : vector<1x128xf32>
      %167 = arith.addf %163, %166 : vector<1x128xf32>
      %168 = math.log %125 : vector<1x128xf32>
      %169 = arith.subf %167, %168 : vector<1x128xf32>
      %170 = math.log %126 : vector<1x128xf32>
      %171 = arith.subf %169, %170 : vector<1x128xf32>
      %c3_76 = arith.constant 3 : index
      %c0_77 = arith.constant 0 : index
      %172 = vector.load %arg6[%c3_76, %c0_77] : memref<8x128xf32, #tpu.memory_space<vmem>>, vector<1x128xf32>
      tpu.vector_store %arg6[%c3_76, %c0_77], %171 {strides = array<i32>} : memref<8x128xf32, #tpu.memory_space<vmem>>, vector<1x128xf32>,
      %c4_78 = arith.constant 4 : index
      %c0_79 = arith.constant 0 : index
      %173 = vector.load %arg6[%c4_78, %c0_79] : memref<8x128xf32, #tpu.memory_space<vmem>>, vector<1x128xf32>
      tpu.vector_store %arg6[%c4_78, %c0_79], %138 {strides = array<i32>} : memref<8x128xf32, #tpu.memory_space<vmem>>, vector<1x128xf32>,
      %c5_80 = arith.constant 5 : index
      %c0_81 = arith.constant 0 : index
      %174 = vector.load %arg6[%c5_80, %c0_81] : memref<8x128xf32, #tpu.memory_space<vmem>>, vector<1x128xf32>
      tpu.vector_store %arg6[%c5_80, %c0_81], %143 {strides = array<i32>} : memref<8x128xf32, #tpu.memory_space<vmem>>, vector<1x128xf32>,
      %c6_82 = arith.constant 6 : index
      %c0_83 = arith.constant 0 : index
      %175 = vector.load %arg6[%c6_82, %c0_83] : memref<8x128xf32, #tpu.memory_space<vmem>>, vector<1x128xf32>
      tpu.vector_store %arg6[%c6_82, %c0_83], %126 {strides = array<i32>} : memref<8x128xf32, #tpu.memory_space<vmem>>, vector<1x128xf32>,
      %cst_84 = arith.constant 0.000000e+00 : f32
      %176 = vector.broadcast %cst_84 : f32 to vector<2x128xf32>
      %c0_85 = arith.constant 0 : index
      %c0_86 = arith.constant 0 : index
      %177 = vector.load %arg5[%c0_85, %c0_86] : memref<2x128xf32, #tpu.memory_space<vmem>>, vector<2x128xf32>
      tpu.vector_store %arg5[%c0_85, %c0_86], %176 {strides = array<i32>} : memref<2x128xf32, #tpu.memory_space<vmem>>, vector<2x128xf32>,
    } else {
    }
    %c0 = arith.constant 0 : index
    %c0_1 = arith.constant 0 : index
    %3 = vector.load %arg2[%c0, %c0_1] : memref<16x128xf32, #tpu.memory_space<vmem>>, vector<16x128xf32>
    %c0_2 = arith.constant 0 : index
    %c0_3 = arith.constant 0 : index
    %4 = vector.load %arg3[%c0_2, %c0_3] : memref<16x128xf32, #tpu.memory_space<vmem>>, vector<16x128xf32>
    %c0_4 = arith.constant 0 : index
    %c0_5 = arith.constant 0 : index
    %5 = vector.load %arg4[%c0_4, %c0_5] : memref<16x128xf32, #tpu.memory_space<vmem>>, vector<16x128xf32>
    %c0_6 = arith.constant 0 : index
    %c0_7 = arith.constant 0 : index
    %6 = vector.load %arg4[%c0_6, %c0_7] : memref<16x128xf32, #tpu.memory_space<vmem>>, vector<1x128xf32>
    %c0_8 = arith.constant 0 : index
    %c0_9 = arith.constant 0 : index
    %7 = vector.load %arg6[%c0_8, %c0_9] : memref<8x128xf32, #tpu.memory_space<vmem>>, vector<1x128xf32>
    %c1 = arith.constant 1 : index
    %c0_10 = arith.constant 0 : index
    %8 = vector.load %arg6[%c1, %c0_10] : memref<8x128xf32, #tpu.memory_space<vmem>>, vector<1x128xf32>
    %c2 = arith.constant 2 : index
    %c0_11 = arith.constant 0 : index
    %9 = vector.load %arg6[%c2, %c0_11] : memref<8x128xf32, #tpu.memory_space<vmem>>, vector<1x128xf32>
    %c3 = arith.constant 3 : index
    %c0_12 = arith.constant 0 : index
    %10 = vector.load %arg6[%c3, %c0_12] : memref<8x128xf32, #tpu.memory_space<vmem>>, vector<1x128xf32>
    %c4 = arith.constant 4 : index
    %c0_13 = arith.constant 0 : index
    %11 = vector.load %arg6[%c4, %c0_13] : memref<8x128xf32, #tpu.memory_space<vmem>>, vector<1x128xf32>
    %c5 = arith.constant 5 : index
    %c0_14 = arith.constant 0 : index
    %12 = vector.load %arg6[%c5, %c0_14] : memref<8x128xf32, #tpu.memory_space<vmem>>, vector<1x128xf32>
    %c6 = arith.constant 6 : index
    %c0_15 = arith.constant 0 : index
    %13 = vector.load %arg6[%c6, %c0_15] : memref<8x128xf32, #tpu.memory_space<vmem>>, vector<1x128xf32>
    %14 = arith.mulf %5, %5 : vector<16x128xf32>
    %cst = arith.constant dense<0.000000e+00> : vector<128xf32>
    %15 = vector.multi_reduction <add>, %14, %cst [0] : vector<16x128xf32> to vector<128xf32>
    %16 = vector.shape_cast %15 : vector<128xf32> to vector<1x128xf32>
    %17 = arith.mulf %3, %5 : vector<16x128xf32>
    %cst_16 = arith.constant dense<0.000000e+00> : vector<128xf32>
    %18 = vector.multi_reduction <add>, %17, %cst_16 [0] : vector<16x128xf32> to vector<128xf32>
    %19 = vector.shape_cast %18 : vector<128xf32> to vector<1x128xf32>
    %20 = arith.mulf %4, %5 : vector<16x128xf32>
    %cst_17 = arith.constant dense<0.000000e+00> : vector<128xf32>
    %21 = vector.multi_reduction <add>, %20, %cst_17 [0] : vector<16x128xf32> to vector<128xf32>
    %22 = vector.shape_cast %21 : vector<128xf32> to vector<1x128xf32>
    %23 = arith.mulf %6, %6 : vector<1x128xf32>
    %24 = arith.subf %16, %23 : vector<1x128xf32>
    %25 = arith.mulf %9, %6 : vector<1x128xf32>
    %26 = arith.subf %19, %25 : vector<1x128xf32>
    %27 = arith.mulf %13, %6 : vector<1x128xf32>
    %28 = arith.subf %22, %27 : vector<1x128xf32>
    %cst_18 = arith.constant 2.000000e+00 : f32
    %29 = vector.broadcast %cst_18 : f32 to vector<1x128xf32>
    %30 = arith.mulf %29, %26 : vector<1x128xf32>
    %31 = arith.subf %24, %30 : vector<1x128xf32>
    %32 = arith.addf %31, %11 : vector<1x128xf32>
    %cst_19 = arith.constant 2.000000e+00 : f32
    %33 = vector.broadcast %cst_19 : f32 to vector<1x128xf32>
    %34 = arith.mulf %33, %28 : vector<1x128xf32>
    %35 = arith.subf %12, %34 : vector<1x128xf32>
    %36 = arith.addf %35, %24 : vector<1x128xf32>
    %37 = arith.subf %7, %32 : vector<1x128xf32>
    %cst_20 = arith.constant 8.000000e+00 : f32
    %38 = vector.broadcast %cst_20 : f32 to vector<1x128xf32>
    %39 = arith.mulf %38, %6 : vector<1x128xf32>
    %40 = arith.subf %37, %39 : vector<1x128xf32>
    %cst_21 = arith.constant 1.600000e+01 : f32
    %41 = vector.broadcast %cst_21 : f32 to vector<1x128xf32>
    %42 = arith.mulf %41, %6 : vector<1x128xf32>
    %43 = arith.mulf %42, %6 : vector<1x128xf32>
    %44 = arith.addf %8, %43 : vector<1x128xf32>
    %cst_22 = arith.constant 4.000000e+00 : f32
    %45 = vector.broadcast %cst_22 : f32 to vector<1x128xf32>
    %46 = arith.mulf %45, %6 : vector<1x128xf32>
    %47 = arith.mulf %46, %32 : vector<1x128xf32>
    %48 = arith.addf %44, %47 : vector<1x128xf32>
    %cst_23 = arith.constant 4.000000e+00 : f32
    %49 = vector.broadcast %cst_23 : f32 to vector<1x128xf32>
    %50 = arith.mulf %49, %9 : vector<1x128xf32>
    %cst_24 = arith.constant 8.000000e+00 : f32
    %51 = vector.broadcast %cst_24 : f32 to vector<1x128xf32>
    %52 = arith.mulf %51, %6 : vector<1x128xf32>
    %53 = arith.addf %52, %36 : vector<1x128xf32>
    %54 = arith.mulf %50, %53 : vector<1x128xf32>
    %55 = arith.addf %48, %54 : vector<1x128xf32>
    %cst_25 = arith.constant 0.000000e+00 : f32
    %56 = vector.broadcast %cst_25 : f32 to vector<1x128xf32>
    %57 = arith.maximumf %55, %56 : vector<1x128xf32>
    %58 = math.sqrt %57 : vector<1x128xf32>
    %cst_26 = arith.constant 0.000000e+00 : f32
    %59 = vector.broadcast %cst_26 : f32 to vector<1x128xf32>
    %60 = arith.subf %59, %40 : vector<1x128xf32>
    %cst_27 = arith.constant 9.99999993E-9 : f32
    %61 = vector.broadcast %cst_27 : f32 to vector<1x128xf32>
    %62 = arith.addf %58, %61 : vector<1x128xf32>
    %cst_28 = arith.constant 1.41421354 : f32
    %63 = vector.broadcast %cst_28 : f32 to vector<1x128xf32>
    %64 = arith.mulf %62, %63 : vector<1x128xf32>
    %65 = arith.divf %60, %64 : vector<1x128xf32>
    %cst_29 = arith.constant 0.000000e+00 : f32
    %66 = vector.broadcast %cst_29 : f32 to vector<1x128xf32>
    %67 = arith.cmpf oge, %65, %66 : vector<1x128xf32>
    %cst_30 = arith.constant 1.000000e+00 : f32
    %cst_31 = arith.constant -1.000000e+00 : f32
    %68 = vector.broadcast %cst_30 : f32 to vector<1x128xf32>
    %69 = vector.broadcast %cst_31 : f32 to vector<1x128xf32>
    %70 = arith.select %67, %68, %69 : vector<1x128xi1>, vector<1x128xf32>
    %71 = math.absf %65 : vector<1x128xf32>
    %cst_32 = arith.constant 0.327591091 : f32
    %72 = vector.broadcast %cst_32 : f32 to vector<1x128xf32>
    %73 = arith.mulf %72, %71 : vector<1x128xf32>
    %cst_33 = arith.constant 1.000000e+00 : f32
    %74 = vector.broadcast %cst_33 : f32 to vector<1x128xf32>
    %75 = arith.addf %74, %73 : vector<1x128xf32>
    %cst_34 = arith.constant 1.000000e+00 : f32
    %76 = vector.broadcast %cst_34 : f32 to vector<1x128xf32>
    %77 = arith.divf %76, %75 : vector<1x128xf32>
    %cst_35 = arith.constant 1.06140542 : f32
    %78 = vector.broadcast %cst_35 : f32 to vector<1x128xf32>
    %79 = arith.mulf %78, %77 : vector<1x128xf32>
    %cst_36 = arith.constant -1.45315206 : f32
    %80 = vector.broadcast %cst_36 : f32 to vector<1x128xf32>
    %81 = arith.addf %79, %80 : vector<1x128xf32>
    %82 = arith.mulf %81, %77 : vector<1x128xf32>
    %cst_37 = arith.constant 1.42141378 : f32
    %83 = vector.broadcast %cst_37 : f32 to vector<1x128xf32>
    %84 = arith.addf %82, %83 : vector<1x128xf32>
    %85 = arith.mulf %84, %77 : vector<1x128xf32>
    %cst_38 = arith.constant -0.284496725 : f32
    %86 = vector.broadcast %cst_38 : f32 to vector<1x128xf32>
    %87 = arith.addf %85, %86 : vector<1x128xf32>
    %88 = arith.mulf %87, %77 : vector<1x128xf32>
    %cst_39 = arith.constant 0.254829586 : f32
    %89 = vector.broadcast %cst_39 : f32 to vector<1x128xf32>
    %90 = arith.addf %88, %89 : vector<1x128xf32>
    %91 = arith.mulf %90, %77 : vector<1x128xf32>
    %cst_40 = arith.constant 0.000000e+00 : f32
    %92 = vector.broadcast %cst_40 : f32 to vector<1x128xf32>
    %93 = arith.subf %92, %71 : vector<1x128xf32>
    %94 = arith.mulf %93, %71 : vector<1x128xf32>
    %95 = math.exp %94 : vector<1x128xf32>
    %96 = arith.mulf %91, %95 : vector<1x128xf32>
    %cst_41 = arith.constant 1.000000e+00 : f32
    %97 = vector.broadcast %cst_41 : f32 to vector<1x128xf32>
    %98 = arith.subf %97, %96 : vector<1x128xf32>
    %99 = arith.mulf %70, %98 : vector<1x128xf32>
    %cst_42 = arith.constant 1.000000e+00 : f32
    %100 = vector.broadcast %cst_42 : f32 to vector<1x128xf32>
    %101 = arith.addf %100, %99 : vector<1x128xf32>
    %cst_43 = arith.constant 5.000000e-01 : f32
    %102 = vector.broadcast %cst_43 : f32 to vector<1x128xf32>
    %103 = arith.mulf %102, %101 : vector<1x128xf32>
    %cst_44 = arith.constant 9.99999993E-9 : f32
    %104 = vector.broadcast %cst_44 : f32 to vector<1x128xf32>
    %105 = arith.addf %103, %104 : vector<1x128xf32>
    %106 = math.log %105 : vector<1x128xf32>
    %cst_45 = arith.constant 0.000000e+00 : f32
    %107 = vector.broadcast %cst_45 : f32 to vector<1x128xf32>
    %108 = arith.subf %107, %106 : vector<1x128xf32>
    %cst_46 = arith.constant 8.000000e+00 : f32
    %109 = vector.broadcast %cst_46 : f32 to vector<1x128xf32>
    %110 = arith.mulf %109, %6 : vector<1x128xf32>
    %111 = arith.addf %10, %110 : vector<1x128xf32>
    %cst_47 = arith.constant 1.000000e+00 : f32
    %112 = vector.broadcast %cst_47 : f32 to vector<1x128xf32>
    %113 = arith.mulf %112, %24 : vector<1x128xf32>
    %114 = arith.addf %111, %113 : vector<1x128xf32>
    %115 = math.log %6 : vector<1x128xf32>
    %116 = arith.subf %114, %115 : vector<1x128xf32>
    %cst_48 = arith.constant 5.000000e-01 : f32
    %117 = vector.broadcast %cst_48 : f32 to vector<1x128xf32>
    %118 = arith.mulf %117, %116 : vector<1x128xf32>
    %c0_49 = arith.constant 0 : index
    %c0_50 = arith.constant 0 : index
    %119 = vector.load %arg5[%c0_49, %c0_50] : memref<2x128xf32, #tpu.memory_space<vmem>>, vector<2x128xf32>
    %120 = tpu.concatenate %108, %118 in 0 : vector<1x128xf32>, vector<1x128xf32> -> vector<2x128xf32>
    %121 = arith.addf %119, %120 : vector<2x128xf32>
    %c0_51 = arith.constant 0 : index
    %c0_52 = arith.constant 0 : index
    %122 = vector.load %arg5[%c0_51, %c0_52] : memref<2x128xf32, #tpu.memory_space<vmem>>, vector<2x128xf32>
    tpu.vector_store %arg5[%c0_51, %c0_52], %121 {strides = array<i32>} : memref<2x128xf32, #tpu.memory_space<vmem>>, vector<2x128xf32>,
    return
  }
  func.func @transform_0(%arg0: i32, %arg1: i32) -> (i32, i32) {
    %c0_i32 = arith.constant 0 : i32
    %c0_i32_0 = arith.constant 0 : i32
    return %c0_i32, %arg0 : i32, i32
  }
  func.func @transform_1(%arg0: i32, %arg1: i32) -> (i32, i32) {
    %c0_i32 = arith.constant 0 : i32
    %c0_i32_0 = arith.constant 0 : i32
    return %c0_i32, %arg0 : i32, i32
  }
  func.func @transform_2(%arg0: i32, %arg1: i32) -> (i32, i32) {
    %c1_i32 = arith.constant 1 : i32
    %0 = arith.muli %arg1, %c1_i32 : i32
    %1 = arith.addi %0, %arg0 : i32
    %c0_i32 = arith.constant 0 : i32
    %c0_i32_0 = arith.constant 0 : i32
    return %c0_i32, %1 : i32, i32
  }
  func.func @transform_3(%arg0: i32, %arg1: i32) -> (i32, i32) {
    %c0_i32 = arith.constant 0 : i32
    %c0_i32_0 = arith.constant 0 : i32
    return %c0_i32, %arg0 : i32, i32
  }
}

</mosaic_0001>

<llo_original>
// kernel: tpu_custom_call.1
$region0: #{tpu_custom_call.1}
  #allocation0 [shape = 'u32[]', space=smem, size = 0x4, offset = 0x4, fixed_abs, tag = 'smem constant byte address 0x4 - core index']
  #allocation1 [shape = 'u32[72,128]{1,0:T(1,128)}', space=vmem, size = 0x9000, scoped, tag = 'internal scratch']
  #allocation2 [shape = 'f32[8,128]{1,0:T(8,128)}', space=vmem, size = 0x1000, scoped, tag = 'scratch operand']
  %s0 = inlined_call_operand.hbm [shape: f32[16,128], index: 0, kind: input, shape index: {}]
  %s1 = inlined_call_operand.hbm [shape: f32[16,128], index: 1, kind: input, shape index: {}]
  %s2 = inlined_call_operand.hbm [shape: f32[16,256], index: 2, kind: input, shape index: {}]
  %s3 = inlined_call_operand.hbm [shape: f32[2,128], index: 3, kind: output, shape index: {}]
  %s4 = sld [smem:[#allocation0]]
  $region61: #{tpu_custom_call.1} parent=0
    _
  %s6 = ssub.s32 1, %s4
  %s7 = scalar_select 0, %s6, %s4
  $region1: #{tpu_custom_call.1} parent=0
    #allocation3 [shape = 'u8[8192]{0}', space=vmem, size = 0x2000, scoped, tag = 'input window, operand 0, single buffered']
    #allocation4 [shape = 's32[2]{0}', space=sflag, size = 0x8, scoped, tag = 'scoped memory for tpu_custom_call.1']
    #allocation5 [shape = 's32[2]{0}', space=sflag, size = 0x8, scoped, tag = 'scoped memory for tpu_custom_call.1']
    #allocation6 [shape = 'u8[8192]{0}', space=vmem, size = 0x2000, scoped, tag = 'input window, operand 1, single buffered']
    #allocation7 [shape = 's32[1]{0}', space=sflag, size = 0x4, scoped, tag = 'scoped memory for tpu_custom_call.1']
    #allocation8 [shape = 'u8[16384]{0}', space=vmem, size = 0x4000, scoped, tag = 'input window, operand 2']
    #allocation9 [shape = 'u8[1024]{0}', space=vmem, size = 0x400, scoped, tag = 'output window, operand 0, single buffered']
    %8 = vsyncpa [#allocation4], 0
    %9 = vsyncpa [#allocation7], 0
    %10 = vsyncpa [#allocation5], 0
    loop: start=0, step=1, limit=4
    $region2: #{tpu_custom_call.1} parent=1 // loop_pre_header
      _
    $region3: #{tpu_custom_call.1} parent=1 // loop_header
      %s12 = sphi 0, %s16
      %p13 = scmp.ge.s32.totalorder %s12, 4
      %s19 = sphi 0, %s31
      %s20 = sphi 0, %s27
      %s21 = sphi 0, %s19
      %s22 = sphi 0, %s20
      %s23 = sphi 0, %s21
      %s24 = sphi 0, %s22
      %s34 = sphi 0, %s36
      %s37 = sphi 0, %s34
      %s38 = sphi 0, %s37
      %s54 = sphi 0, %s38
      %s60 = sphi 0, %s62
      %s63 = sphi 0, %s60
      %s64 = sphi 0, %s63
      %s80 = sphi 0, %s64
      %s88 = sphi 0, %s90
      %s91 = sphi 0, %s88
      %s92 = sphi 0, %s91
      %s108 = sphi 0, %s92
      %s114 = sphi 0, %s116
      %s117 = sphi 0, %s114
      %s118 = sphi 0, %s117
      %s134 = sphi 0, %s118
    $region4: #{tpu_custom_call.1} parent=1 // loop_header_branch
      %15 = sbr.rel (%p13) target = $region8
    $region5: #{tpu_custom_call.1} parent=1 // loop_body
      %s17 = ssub.s32 %s12, 1
      %s18 = ssub.s32 %s12, 2
      %s25 = sadd.s32 1, %s20
      %p26 = scmp.ge.s32.totalorder %s25, 2
      %s27 = scalar_select %p26, 0, %s25
      %s28 = sadd.s32 1, %s19
      %s29 = scalar_select %p26, %s28, %s19
      %p30 = scmp.ge.s32.totalorder %s29, 1
      %s31 = scalar_select %p30, 0, %s29
      %s32 = ssub.s32 %s19, %s31
      %p33 = scmp.eq.s32.totalorder %s32, 0
      %s35 = sadd.s32 %s34, 1
      %s36 = scalar_select %p33, %s34, %s35
      %p39 = pneg %p33
      %p40 = scmp.eq.s32.totalorder %s12, 1
      %p41 = por %p39, %p40
      %p42 = scmp.ne.s32.totalorder %s34, %s37
      %p43 = scmp.eq.s32.totalorder %s12, 0
      %p44 = por %p42, %p43
      %p45 = scmp.ne.s32.totalorder %s34, %s37
      %p46 = scmp.eq.s32.totalorder %s17, 1
      %p47 = por %p45, %p46
      %p48 = scmp.ne.s32.totalorder %s37, %s38
      %p49 = scmp.eq.s32.totalorder %s17, 0
      %p50 = por %p48, %p49
      %p51 = scmp.ne.s32.totalorder %s37, %s38
      %p52 = scmp.eq.s32.totalorder %s18, 1
      %p53 = por %p51, %p52
      %p55 = scmp.ne.s32.totalorder %s38, %s54
      %p56 = scmp.eq.s32.totalorder %s18, 0
      %p57 = por %p55, %p56
      %s58 = ssub.s32 %s19, %s31
      %p59 = scmp.eq.s32.totalorder %s58, 0
      %s61 = sadd.s32 %s60, 1
      %s62 = scalar_select %p59, %s60, %s61
      %p65 = pneg %p59
      %p66 = scmp.eq.s32.totalorder %s12, 1
      %p67 = por %p65, %p66
      %p68 = scmp.ne.s32.totalorder %s60, %s63
      %p69 = scmp.eq.s32.totalorder %s12, 0
      %p70 = por %p68, %p69
      %p71 = scmp.ne.s32.totalorder %s60, %s63
      %p72 = scmp.eq.s32.totalorder %s17, 1
      %p73 = por %p71, %p72
      %p74 = scmp.ne.s32.totalorder %s63, %s64
      %p75 = scmp.eq.s32.totalorder %s17, 0
      %p76 = por %p74, %p75
      %p77 = scmp.ne.s32.totalorder %s63, %s64
      %p78 = scmp.eq.s32.totalorder %s18, 1
      %p79 = por %p77, %p78
      %p81 = scmp.ne.s32.totalorder %s64, %s80
      %p82 = scmp.eq.s32.totalorder %s18, 0
      %p83 = por %p81, %p82
      %s84 = sadd.s32 %s20, %s19
      %s85 = sadd.s32 %s27, %s31
      %s86 = ssub.s32 %s84, %s85
      %p87 = scmp.eq.s32.totalorder %s86, 0
      %s89 = sadd.s32 %s88, 1
      %s90 = scalar_select %p87, %s88, %s89
      %p93 = pneg %p87
      %p94 = scmp.eq.s32.totalorder %s12, 1
      %p95 = por %p93, %p94
      %p96 = scmp.ne.s32.totalorder %s88, %s91
      %p97 = scmp.eq.s32.totalorder %s12, 0
      %p98 = por %p96, %p97
      %p99 = scmp.ne.s32.totalorder %s88, %s91
      %p100 = scmp.eq.s32.totalorder %s17, 1
      %p101 = por %p99, %p100
      %p102 = scmp.ne.s32.totalorder %s91, %s92
      %p103 = scmp.eq.s32.totalorder %s17, 0
      %p104 = por %p102, %p103
      %p105 = scmp.ne.s32.totalorder %s91, %s92
      %p106 = scmp.eq.s32.totalorder %s18, 1
      %p107 = por %p105, %p106
      %p109 = scmp.ne.s32.totalorder %s92, %s108
      %p110 = scmp.eq.s32.totalorder %s18, 0
      %p111 = por %p109, %p110
      %s112 = ssub.s32 %s19, %s31
      %p113 = scmp.eq.s32.totalorder %s112, 0
      %s115 = sadd.s32 %s114, 1
      %s116 = scalar_select %p113, %s114, %s115
      %p119 = pneg %p113
      %p120 = scmp.eq.s32.totalorder %s12, 1
      %p121 = por %p119, %p120
      %p122 = scmp.ne.s32.totalorder %s114, %s117
      %p123 = scmp.eq.s32.totalorder %s12, 0
      %p124 = por %p122, %p123
      %p125 = scmp.ne.s32.totalorder %s114, %s117
      %p126 = scmp.eq.s32.totalorder %s17, 1
      %p127 = por %p125, %p126
      %p128 = scmp.ne.s32.totalorder %s117, %s118
      %p129 = scmp.eq.s32.totalorder %s17, 0
      %p130 = por %p128, %p129
      %p131 = scmp.ne.s32.totalorder %s117, %s118
      %p132 = scmp.eq.s32.totalorder %s18, 1
      %p133 = por %p131, %p132
      %p135 = scmp.ne.s32.totalorder %s118, %s134
      %p136 = scmp.eq.s32.totalorder %s18, 0
      %p137 = por %p135, %p136
      %p138 = scmp.le.s32.totalorder 1, %s12
      %p139 = scmp.lt.s32.totalorder %s12, 3
      %p140 = pnand %p138, %p139
      %p141 = pneg %p140
      // Predicated region
      $region9: #{tpu_custom_call.1} parent=5 // pred_check
        _
      $region10: #{tpu_custom_call.1} parent=5 // pred_check_branch
        %143 = sbr.rel (%p140) target = $region12
      $region11: #{tpu_custom_call.1} parent=5 // pred_region
        %s144 = ssub.s32 %s12, 1
        // Predicated region
        $region13: #{tpu_custom_call.1} parent=11 // pred_check
          %p145 = pneg %p50
        $region14: #{tpu_custom_call.1} parent=11 // pred_check_branch
          %147 = sbr.rel (%p145) target = $region16
        $region15: #{tpu_custom_call.1} parent=11 // pred_region
          %149 = vsyncadd [#allocation4], 0
          %s150 = smul.addr %s21, 8
          %s151 = scalar_lea.hbm %s0, %s150
          %s152 = sshll.u32 %s151, 4
          %s153 = int_to_ptr.hbm [resolvable:$true] %s152
          %s154 = sshll.u32 [#allocation3], 4
          %s155 = int_to_ptr.vmem [resolvable:$true] %s154
          %160 = dma.hbm_to_vmem [thread:$0]  %s153, 256, %s155, [#allocation4], 128, 128, 8
        $region16: #{tpu_custom_call.1} parent=11 // pred_fallthru
          _
        // Predicated region
        $region17: #{tpu_custom_call.1} parent=11 // pred_check
          %p161 = pneg %p76
        $region18: #{tpu_custom_call.1} parent=11 // pred_check_branch
          %163 = sbr.rel (%p161) target = $region20
        $region19: #{tpu_custom_call.1} parent=11 // pred_region
          %165 = vsyncadd [#allocation7], 0
          %s166 = smul.addr %s21, 8
          %s167 = scalar_lea.hbm %s1, %s166
          %s168 = sshll.u32 %s167, 4
          %s169 = int_to_ptr.hbm [resolvable:$true] %s168
          %s170 = sshll.u32 [#allocation6], 4
          %s171 = int_to_ptr.vmem [resolvable:$true] %s170
          %176 = dma.hbm_to_vmem [thread:$0]  %s169, 256, %s171, [#allocation7], 128, 128, 8
        $region20: #{tpu_custom_call.1} parent=11 // pred_fallthru
          _
      $region12: #{tpu_custom_call.1} parent=5 // pred_fallthru
        _
      %p177 = scmp.lt.s32.totalorder %s12, 2
      // Predicated region
      $region21: #{tpu_custom_call.1} parent=5 // pred_check
        %p178 = pneg %p177
      $region22: #{tpu_custom_call.1} parent=5 // pred_check_branch
        %180 = sbr.rel (%p178) target = $region24
      $region23: #{tpu_custom_call.1} parent=5 // pred_region
        // Predicated region
        $region25: #{tpu_custom_call.1} parent=23 // pred_check
          %p181 = pneg %p98
        $region26: #{tpu_custom_call.1} parent=23 // pred_check_branch
          %183 = sbr.rel (%p181) target = $region28
        $region27: #{tpu_custom_call.1} parent=23 // pred_region
          %s184 = sand.u32 %s12, 1
          %s185 = scalar_lea.sflag [#allocation4], %s184
          %s186 = sand.u32 %s88, 1
          %s187 = smul.addr %s186, 16
          %s188 = scalar_lea.vmem [#allocation8], %s187
          %s189 = sadd.s32 %s20, %s19
          %191 = vsyncadd %s185, 0
          %s192 = smul.addr %s189, 8
          %s193 = scalar_lea.hbm %s2, %s192
          %s194 = sshll.u32 %s193, 4
          %s195 = int_to_ptr.hbm [resolvable:$true] %s194
          %s196 = sshll.u32 %s188, 4
          %s197 = int_to_ptr.vmem [resolvable:$true] %s196
          %202 = dma.hbm_to_vmem [thread:$0]  %s195, 256, %s197, %s185, 256, 128, 8
        $region28: #{tpu_custom_call.1} parent=23 // pred_fallthru
          _
      $region24: #{tpu_custom_call.1} parent=5 // pred_fallthru
        _
      %p203 = scmp.le.s32.totalorder 1, %s12
      %p204 = scmp.lt.s32.totalorder %s12, 3
      %p205 = pnand %p203, %p204
      %p206 = pneg %p205
      // Predicated region
      $region29: #{tpu_custom_call.1} parent=5 // pred_check
        _
      $region30: #{tpu_custom_call.1} parent=5 // pred_check_branch
        %208 = sbr.rel (%p205) target = $region32
      $region31: #{tpu_custom_call.1} parent=5 // pred_region
        %s209 = ssub.s32 %s12, 1
        // Predicated region
        $region33: #{tpu_custom_call.1} parent=31 // pred_check
          %p210 = pneg %p50
        $region34: #{tpu_custom_call.1} parent=31 // pred_check_branch
          %212 = sbr.rel (%p210) target = $region36
        $region35: #{tpu_custom_call.1} parent=31 // pred_region
          %214 = dma.done [#allocation4], 256
        $region36: #{tpu_custom_call.1} parent=31 // pred_fallthru
          _
        // Predicated region
        $region37: #{tpu_custom_call.1} parent=31 // pred_check
          %p215 = pneg %p76
        $region38: #{tpu_custom_call.1} parent=31 // pred_check_branch
          %217 = sbr.rel (%p215) target = $region40
        $region39: #{tpu_custom_call.1} parent=31 // pred_region
          %219 = dma.done [#allocation7], 256
        $region40: #{tpu_custom_call.1} parent=31 // pred_fallthru
          _
        %s220 = sand.u32 %s17, 1
        %s221 = scalar_lea.sflag [#allocation4], %s220
        %s222 = sand.u32 %s91, 1
        %s223 = smul.addr %s222, 16
        %s224 = scalar_lea.vmem [#allocation8], %s223
        // Predicated region
        $region41: #{tpu_custom_call.1} parent=31 // pred_check
          %p225 = pneg %p104
        $region42: #{tpu_custom_call.1} parent=31 // pred_check_branch
          %227 = sbr.rel (%p225) target = $region44
        $region43: #{tpu_custom_call.1} parent=31 // pred_region
          %229 = dma.done %s221, 256
        $region44: #{tpu_custom_call.1} parent=31 // pred_fallthru
          _
        %p230 = pneg %p50
        %p231 = pneg %p47
        %p232 = pneg %p76
        %p233 = pneg %p73
        %s234 = sand.u32 %s17, 1
        %s235 = scalar_lea.sflag [#allocation4], %s234
        %s236 = sand.u32 %s91, 1
        %s237 = smul.addr %s236, 16
        %s238 = scalar_lea.vmem [#allocation8], %s237
        %p239 = pneg %p104
        %p240 = pneg %p101
        %p241 = pneg %p130
        %p242 = pneg %p127
        %s243 = sadd.s32 %s22, %s21
        %p244 = scmp.eq.s32.totalorder %s22, 0
        // Predicated region
        $region45: #{tpu_custom_call.1} parent=31 // pred_check
          %p245 = pneg %p244
        $region46: #{tpu_custom_call.1} parent=31 // pred_check_branch
          %247 = sbr.rel (%p245) target = $region48
        $region47: #{tpu_custom_call.1} parent=31 // pred_region
          %v248 = vld [vmem:[#allocation3] sm:$0xff]
          %v249 = vld [vmem:[#allocation3 + $0x8] sm:$0xff]
          %v250 = vld [vmem:[#allocation6] sm:$0xff]
          %v251 = vld [vmem:[#allocation6 + $0x8] sm:$0xff]
          %v252 = vld [vmem:[#allocation3] sm:$0x1]
          %v253 = vld [vmem:[#allocation6] sm:$0x1]
          %v254 = vsub.f32 %v250, %v248
          %v255 = vsub.f32 %v251, %v249
          %v256 = vmul.f32 %v254, %v254
          %v257 = vmul.f32 %v255, %v255
          %v258 = vadd.f32 %v256, %v257
          %v259 = vrot.slane %v258, 4
          %v260 = vadd.f32 %v258, %v259
          %v261 = vrot.slane %v260, 2
          %v262 = vadd.f32 %v260, %v261
          %v263 = vrot.slane %v262, 1
          %v264 = vadd.f32 %v262, %v263
          %v265 = vsub.f32 %v253, %v252
          %v266 = vmul.f32 %v265, %v265
          %v267 = vsub.f32 %v264, %v266
          %v268 = vmul.f32 %v248, %v248
          %v269 = vmul.f32 %v249, %v249
          %v270 = vadd.f32 %v268, %v269
          %v271 = vrot.slane %v270, 4
          %v272 = vadd.f32 %v270, %v271
          %v273 = vrot.slane %v272, 2
          %v274 = vadd.f32 %v272, %v273
          %v275 = vrot.slane %v274, 1
          %v276 = vadd.f32 %v274, %v275
          %v277 = vmul.f32 %v252, %v252
          %v278 = vsub.f32 %v276, %v277
          %v279 = vmul.f32 %v250, %v250
          %v280 = vmul.f32 %v251, %v251
          %v281 = vadd.f32 %v279, %v280
          %v282 = vrot.slane %v281, 4
          %v283 = vadd.f32 %v281, %v282
          %v284 = vrot.slane %v283, 2
          %v285 = vadd.f32 %v283, %v284
          %v286 = vrot.slane %v285, 1
          %v287 = vadd.f32 %v285, %v286
          %v288 = vmul.f32 %v253, %v253
          %v289 = vsub.f32 %v287, %v288
          %v290 = vmul.f32 %v253, 8.0
          %v291 = vadd.f32 %v267, %v290
          %292 = vst [vmem:[#allocation2] sm:$0x1] %v291
          %v293 = vmul.f32 %v253, 16.0
          %v294 = vmul.f32 %v293, %v253
          %v295 = vmul.f32 %v252, 32.0
          %v296 = vmul.f32 %v295, %v253
          %v297 = vadd.f32 %v294, %v296
          %v298 = vmul.f32 %v253, 4.0
          %v299 = vmul.f32 %v298, %v267
          %v300 = vadd.f32 %v297, %v299
          %301 = vst [vmem:[#allocation2 + $0x1] sm:$0x1] %v300
          %302 = vst [vmem:[#allocation2 + $0x2] sm:$0x1] %v252
          %v303 = vadd.f32 %v252, %v253
          %v304 = vmul.f32 %v303, 8.0
          %v305 = vadd.f32 %v278, %v289
          %v306 = vadd.f32 %v304, %v305
          %v307 = vlog2.pop %v252
          %v308 = vmul.f32 %v307, 0.6931472
          %v309 = vsub.f32 %v306, %v308
          %v310 = vlog2.pop %v253
          %v311 = vmul.f32 %v310, 0.6931472
          %v312 = vsub.f32 %v309, %v311
          %313 = vst [vmem:[#allocation2 + $0x3] sm:$0x1] %v312
          %314 = vst [vmem:[#allocation2 + $0x4] sm:$0x1] %v278
          %315 = vst [vmem:[#allocation2 + $0x5] sm:$0x1] %v289
          %316 = vst [vmem:[#allocation2 + $0x6] sm:$0x1] %v253
          %317 = vst [vmem:[#allocation9] sm:$0x3] 0.0
        $region48: #{tpu_custom_call.1} parent=31 // pred_fallthru
          _
        %v318 = vld [vmem:[#allocation3] sm:$0xff]
        %v319 = vld [vmem:[#allocation3 + $0x8] sm:$0xff]
        %v320 = vld [vmem:[#allocation6] sm:$0xff]
        %v321 = vld [vmem:[#allocation6 + $0x8] sm:$0xff]
        %v322 = vld [vmem:[%s224] sm:$0xff]
        %v323 = vld [vmem:[%s224 + $0x8] sm:$0xff]
        %v324 = vld [vmem:[%s224] sm:$0x1]
        %v325 = vld [vmem:[#allocation2] sm:$0x1]
        %v326 = vld [vmem:[#allocation2 + $0x1] sm:$0x1]
        %v327 = vld [vmem:[#allocation2 + $0x2] sm:$0x1]
        %v328 = vld [vmem:[#allocation2 + $0x3] sm:$0x1]
        %v329 = vld [vmem:[#allocation2 + $0x4] sm:$0x1]
        %v330 = vld [vmem:[#allocation2 + $0x5] sm:$0x1]
        %v331 = vld [vmem:[#allocation2 + $0x6] sm:$0x1]
        %v332 = vmul.f32 %v322, %v322
        %v333 = vmul.f32 %v323, %v323
        %v334 = vadd.f32 %v332, %v333
        %v335 = vrot.slane %v334, 4
        %v336 = vadd.f32 %v334, %v335
        %v337 = vrot.slane %v336, 2
        %v338 = vadd.f32 %v336, %v337
        %v339 = vrot.slane %v338, 1
        %v340 = vadd.f32 %v338, %v339
        %v341 = vmul.f32 %v318, %v322
        %v342 = vmul.f32 %v319, %v323
        %v343 = vadd.f32 %v341, %v342
        %v344 = vrot.slane %v343, 4
        %v345 = vadd.f32 %v343, %v344
        %v346 = vrot.slane %v345, 2
        %v347 = vadd.f32 %v345, %v346
        %v348 = vrot.slane %v347, 1
        %v349 = vadd.f32 %v347, %v348
        %v350 = vmul.f32 %v320, %v322
        %v351 = vmul.f32 %v321, %v323
        %v352 = vadd.f32 %v350, %v351
        %v353 = vrot.slane %v352, 4
        %v354 = vadd.f32 %v352, %v353
        %v355 = vrot.slane %v354, 2
        %v356 = vadd.f32 %v354, %v355
        %v357 = vrot.slane %v356, 1
        %v358 = vadd.f32 %v356, %v357
        %v359 = vmul.f32 %v324, %v324
        %v360 = vsub.f32 %v340, %v359
        %v361 = vmul.f32 %v327, %v324
        %v362 = vsub.f32 %v349, %v361
        %v363 = vmul.f32 %v331, %v324
        %v364 = vsub.f32 %v358, %v363
        %v365 = vmul.f32 %v362, 2.0
        %v366 = vsub.f32 %v360, %v365
        %v367 = vadd.f32 %v366, %v329
        %v368 = vmul.f32 %v364, 2.0
        %v369 = vsub.f32 %v330, %v368
        %v370 = vadd.f32 %v369, %v360
        %v371 = vsub.f32 %v325, %v367
        %v372 = vmul.f32 %v324, 8.0
        %v373 = vsub.f32 %v371, %v372
        %v374 = vmul.f32 %v324, 16.0
        %v375 = vmul.f32 %v374, %v324
        %v376 = vadd.f32 %v326, %v375
        %v377 = vmul.f32 %v324, 4.0
        %v378 = vmul.f32 %v377, %v367
        %v379 = vadd.f32 %v376, %v378
        %v380 = vmul.f32 %v327, 4.0
        %v381 = vadd.f32 %v372, %v370
        %v382 = vmul.f32 %v380, %v381
        %v383 = vadd.f32 %v379, %v382
        %v384 = vmax.f32 %v383, 0.0
        %v385 = vrsqrt.pop %v384
        %v386 = vmul.f32 %v385, %v384
        %v387 = vmul.f32 %v386, %v385
        %v388 = vmul.f32 0.5, %v387
        %v389 = vsub.f32 1.5, %v388
        %v390 = vmul.f32 %v385, %v389
        %v391 = vmul.f32 %v384, %v390
        %vm392 = vcmp.eq.f32.partialorder %v384, inf
        %v393 = vsel %vm392, %v384, %v391
        %vm394 = vcmp.eq.f32.partialorder %v384, 0.0
        %v395 = vand.u32 %v384, 2147483648
        %v396 = vsel %vm394, %v395, %v393
        %v397 = vsub.f32 0.0, %v373
        %v398 = vadd.f32 %v396, 1e-08
        %v399 = vmul.f32 %v398, 1.4142135
        %v400 = vrcp.pop %v399
        %v401 = vmul.f32 %v399, %v400
        %v402 = vsub.f32 1.0, %v401
        %v403 = vmul.f32 %v400, %v402
        %v404 = vadd.f32 %v400, %v403
        %vm405 = vweird.f32 %v399
        %vm406 = vweird.f32 %v400
        %vm407 = vmor %vm405, %vm406
        %v408 = vsel %vm407, %v400, %v404
        %v409 = vand.u32 2147483647, %v399
        %vm410 = vcmp.eq.f32.partialorder %v409, 8.507059e+37
        %v411 = vand.u32 %v399, 2147483648
        %v412 = vor.u32 1.1754944e-38, %v411
        %v413 = vsel %vm410, %v412, %v408
        %v414 = vmul.f32 %v397, %v413
        %vm415 = vcmp.ge.f32.partialorder %v414, 0.0
        %v416 = vsel %vm415, 1.0, -1.0
        %v417 = vand.u32 2147483647, %v414
        %v418 = vmul.f32 %v417, 0.3275911
        %v419 = vadd.f32 %v418, 1.0
        %v420 = vrcp.pop %v419
        %v421 = vmul.f32 %v419, %v420
        %v422 = vsub.f32 1.0, %v421
        %v423 = vmul.f32 %v420, %v422
        %v424 = vadd.f32 %v420, %v423
        %vm425 = vweird.f32 %v419
        %vm426 = vweird.f32 %v420
        %vm427 = vmor %vm425, %vm426
        %v428 = vsel %vm427, %v420, %v424
        %v429 = vand.u32 2147483647, %v419
        %vm430 = vcmp.eq.f32.partialorder %v429, 8.507059e+37
        %v431 = vand.u32 %v419, 2147483648
        %v432 = vor.u32 1.1754944e-38, %v431
        %v433 = vsel %vm430, %v432, %v428
        %v434 = vmul.f32 1.0, %v433
        %v435 = vmul.f32 %v434, 1.0614054
        %v436 = vadd.f32 %v435, -1.4531521
        %v437 = vmul.f32 %v436, %v434
        %v438 = vadd.f32 %v437, 1.4214138
        %v439 = vmul.f32 %v438, %v434
        %v440 = vadd.f32 %v439, -0.28449672
        %v441 = vmul.f32 %v440, %v434
        %v442 = vadd.f32 %v441, 0.2548296
        %v443 = vmul.f32 %v442, %v434
        %v444 = vsub.f32 0.0, %v417
        %v445 = vmul.f32 %v444, %v417
        %v446 = vmul.f32 %v445, 1.442695
        %v447 = vpow.pop %v446
        %v448 = vmul.f32 %v443, %v447
        %v449 = vsub.f32 1.0, %v448
        %v450 = vmul.f32 %v416, %v449
        %v451 = vadd.f32 %v450, 1.0
        %v452 = vmul.f32 %v451, 0.5
        %v453 = vadd.f32 %v452, 1e-08
        %v454 = vlog2.pop %v453
        %v455 = vmul.f32 %v454, 0.6931472
        %v456 = vsub.f32 0.0, %v455
        %v457 = vadd.f32 %v328, %v372
        %v458 = vadd.f32 %v457, %v360
        %v459 = vlog2.pop %v324
        %v460 = vmul.f32 %v459, 0.6931472
        %v461 = vsub.f32 %v458, %v460
        %v462 = vmul.f32 %v461, 0.5
        %v463 = vld [vmem:[#allocation9] sm:$0x3]
        %v465 = vrot.slane %v462, 7
        %vm467 = vcmask 1040384
        %v468 = vsel %vm467, %v456, %v465
        %v469 = vadd.f32 %v463, %v468
        %470 = vst [vmem:[#allocation9] sm:$0x3] %v469
        // Predicated region
        $region49: #{tpu_custom_call.1} parent=31 // pred_check
          %p471 = pneg %p127
        $region50: #{tpu_custom_call.1} parent=31 // pred_check_branch
          %473 = sbr.rel (%p471) target = $region52
        $region51: #{tpu_custom_call.1} parent=31 // pred_region
          %475 = vsyncadd [#allocation5], 0
          %s476 = smul.addr %s21, 2
          %s477 = scalar_lea.hbm %s3, %s476
          %s479 = sshll.u32 [#allocation9], 4
          %s480 = int_to_ptr.vmem [resolvable:$true] %s479
          %s481 = sshll.u32 %s477, 4
          %s482 = int_to_ptr.hbm [resolvable:$true] %s481
          %484 = dma.vmem_to_hbm [thread:$0]  %s480, 32, %s482, [#allocation5]
        $region52: #{tpu_custom_call.1} parent=31 // pred_fallthru
          _
        // Predicated region
        $region53: #{tpu_custom_call.1} parent=31 // pred_check
          %p485 = pneg %p127
        $region54: #{tpu_custom_call.1} parent=31 // pred_check_branch
          %487 = sbr.rel (%p485) target = $region56
        $region55: #{tpu_custom_call.1} parent=31 // pred_region
          %489 = dma.done [#allocation5], 32
        $region56: #{tpu_custom_call.1} parent=31 // pred_fallthru
          _
      $region32: #{tpu_custom_call.1} parent=5 // pred_fallthru
        _
      %p490 = scmp.le.s32.totalorder 2, %s12
      // Predicated region
      $region57: #{tpu_custom_call.1} parent=5 // pred_check
        %p491 = pneg %p490
      $region58: #{tpu_custom_call.1} parent=5 // pred_check_branch
        %493 = sbr.rel (%p491) target = $region60
      $region59: #{tpu_custom_call.1} parent=5 // pred_region
        %s494 = ssub.s32 %s12, 2
      $region60: #{tpu_custom_call.1} parent=5 // pred_fallthru
        _
    $region6: #{tpu_custom_call.1} parent=1 // loop_footer
      %s16 = sadd.s32 1, %s12
    $region7: #{tpu_custom_call.1} parent=1 // loop_footer_branch
      %11 = sbr.rel target = $region3
    $region8: #{tpu_custom_call.1} parent=1 // loop_exit
      _
    %495 = vsyncpa [#allocation4], 1
    %s496 = scalar_lea.sflag [#allocation4], 1
    %497 = vsyncpa %s496, 1
    %498 = vsyncpa [#allocation7], 1
    %499 = vsyncpa [#allocation5], 1
    %s500 = scalar_lea.sflag [#allocation5], 1
    %501 = vsyncpa %s500, 1

</llo_original>
